<compile_context>
chip_gen: v6e
topology: v6e:2x2x1
jax: 0.10.0
libtpu: 0.0.40
codegen_flags: <defaults>
</compile_context>

<pallas_src>
import functools

import jax
import jax.numpy as jnp
from jax import lax
from jax.experimental import pallas as pl
from jax.experimental.pallas import tpu as pltpu


def _relu(x):
    return jnp.maximum(x, 0.0)


# ---------------------------------------------------------------------------
# Tiling helpers.
# ---------------------------------------------------------------------------
def _pick_row_tile(m, cap=1024):
    """Largest 16-aligned row tile dividing m that leaves >=2 grid steps."""
    upper = min(cap, m // 2)
    for tm in range(upper, 15, -1):
        if m % tm == 0 and tm % 16 == 0:
            return tm
    return m


def _pick_gb(b, cap=8):
    """Graphs per EdgeConv block: divides b, capped at 8 (keeps the
    block-diagonal selection scratch ~2 MiB for N=32,K=16) and leaves >=2
    grid steps when possible (v7x megacore)."""
    cap = max(1, min(cap, b // 2 if b >= 2 else b))
    for g in range(cap, 0, -1):
        if b % g == 0:
            return g
    return 1


# ---------------------------------------------------------------------------
# Encoder: Linear(4,64) -> ReLU -> Linear(64,128) -> ReLU, tiled over rows.
# ---------------------------------------------------------------------------
def encoder_kernel(x_ref, w1_ref, b1_ref, w2_ref, b2_ref, out_ref):
    x = x_ref[...].astype(jnp.bfloat16)
    h = _relu(jnp.dot(x, w1_ref[...], preferred_element_type=jnp.float32)
              + b1_ref[...])
    y = _relu(jnp.dot(h.astype(jnp.bfloat16), w2_ref[...],
                      preferred_element_type=jnp.float32) + b2_ref[...])
    out_ref[...] = y.astype(out_ref.dtype)


def encoder(x2d, w1, b1, w2, b2, row_tile=1024):
    m, fin = x2d.shape
    tm = _pick_row_tile(m, row_tile)
    h1, h2 = w1.shape[1], w2.shape[1]
    return pl.pallas_call(
        encoder_kernel,
        grid=(m // tm,),
        in_specs=[
            pl.BlockSpec((tm, fin), lambda i: (i, 0)),
            pl.BlockSpec((fin, h1), lambda i: (0, 0)),
            pl.BlockSpec((1, h1), lambda i: (0, 0)),
            pl.BlockSpec((h1, h2), lambda i: (0, 0)),
            pl.BlockSpec((1, h2), lambda i: (0, 0)),
        ],
        out_specs=pl.BlockSpec((tm, h2), lambda i: (i, 0)),
        out_shape=jax.ShapeDtypeStruct((m, h2), jnp.bfloat16),
        compiler_params=pltpu.CompilerParams(dimension_semantics=("parallel",)),
    )(x2d, w1, b1, w2, b2)


# ---------------------------------------------------------------------------
# Fused EdgeConv block (all graphs of the block batched together).
#   out_i = max_{j in knn_k(i)} ( relu(x_i@wp + x_j@wq + ba) @ wb ) + bb
# where wp/wq come from the linearity of the first MLP linear:
#   [x_i, x_j - x_i] @ Wa = x_i @ (Wa[:C] - Wa[C:]) + x_j @ Wa[C:]
# ---------------------------------------------------------------------------
def _edgeconv_block(x_ref, wp, wq, ba, wb, bb, sel_ref, k):
    gb, n, c = x_ref.shape
    gn = gb * n
    h = wp.shape[1]
    x = x_ref[...].reshape(gn, c).astype(jnp.bfloat16)

    # Pairwise ordering scores (bf16 inputs, f32 accumulation, consistent).
    g = lax.dot_general(x, x, (((1,), (1,)), ((), ())),
                        preferred_element_type=jnp.float32)          # (gn, gn)
    row = lax.broadcasted_iota(jnp.int32, (gn, gn), 0)
    col = lax.broadcasted_iota(jnp.int32, (gn, gn), 1)
    diag = row == col
    same_graph = (row // n) == (col // n)
    sq_j = jnp.sum(jnp.where(diag, g, 0.0), axis=0, keepdims=True)   # (1, gn)
    big = jnp.float32(3.0e38)
    # Per-row ordering only needs ||x_j||^2 - 2*x_i.x_j; mask self/cross-graph.
    d = jnp.where(same_graph & (~diag), sq_j - 2.0 * g, big)

    # Per-node projections of the first MLP linear, batched over the block.
    p = jnp.dot(x, wp, preferred_element_type=jnp.float32) + ba      # (gn,H) f32
    q = jnp.dot(x, wq, preferred_element_type=jnp.bfloat16)          # (gn,H) bf16

    # K argmin rounds over the whole (gn, gn) slab; one-hot rows are stacked
    # round-major into the selection scratch (block-diagonal per graph).
    # TODO(synk): ties break to the lowest column index; PyG's knn_graph may
    # order exactly-equal distances differently (benign).
    dd = d
    for r in range(k):
        m = jnp.min(dd, axis=1, keepdims=True)                       # (gn, 1)
        idx = jnp.min(jnp.where(dd == m, col, gn), axis=1, keepdims=True)
        onehot = col == idx
        dd = jnp.where(onehot, big, dd)
        sel_ref[pl.ds(r * gn, gn), :] = onehot.astype(jnp.bfloat16)

    # Single gather matmul over all k*gn edges, then second linear + max-agg.
    qn = jnp.dot(sel_ref[...], q, preferred_element_type=jnp.float32)  # (k*gn,H)
    h1 = _relu(qn.reshape(k, gn, h) + p[None, :, :])
    h1 = h1.astype(jnp.bfloat16).reshape(k * gn, h)
    h2 = jnp.dot(h1, wb, preferred_element_type=jnp.float32)           # (k*gn,H)
    return jnp.max(h2.reshape(k, gn, h), axis=0) + bb                  # (gn, H)


def edgeconv_kernel(k, x_ref, wp_ref, wq_ref, ba_ref, wb_ref, bb_ref,
                    out_ref, sel_ref):
    gb, n, _ = x_ref.shape
    nodes = _edgeconv_block(x_ref, wp_ref[...], wq_ref[...], ba_ref[...],
                            wb_ref[...], bb_ref[...], sel_ref, k)
    out_ref[...] = nodes.astype(out_ref.dtype).reshape(gb, n, nodes.shape[-1])


def edgeconv_pool_head_kernel(k, x_ref, wp_ref, wq_ref, ba_ref, wb_ref, bb_ref,
                              wh1_ref, bh1_ref, wh2t_ref, bh2_ref,
                              out_ref, sel_ref):
    # Last EdgeConv fused with global_mean_pool and the output MLP.
    gb, n, _ = x_ref.shape
    gn = gb * n
    nodes = _edgeconv_block(x_ref, wp_ref[...], wq_ref[...], ba_ref[...],
                            wb_ref[...], bb_ref[...], sel_ref, k)   # (gn, H) f32

    # global_mean_pool as a small f32 matmul with a block-averaging matrix.
    gr = lax.broadcasted_iota(jnp.int32, (gb, gn), 0)
    gc = lax.broadcasted_iota(jnp.int32, (gb, gn), 1) // n
    avg = jnp.where(gr == gc, jnp.float32(1.0 / n), 0.0)            # (gb, gn)
    pooled = jnp.dot(avg, nodes, preferred_element_type=jnp.float32)  # (gb, H)

    # output MLP: Linear(H,64) -> ReLU -> Linear(64,1)
    hh = _relu(jnp.dot(pooled.astype(jnp.bfloat16), wh1_ref[...],
                       preferred_element_type=jnp.float32) + bh1_ref[...])
    yy = jnp.sum(hh * wh2t_ref[...], axis=-1, keepdims=True) + bh2_ref[...]

    for gi in range(gb):                 # tiny per-graph scalar writes
        out_ref[gi] = yy[gi:gi + 1, :]


def _edgeconv_in_specs(gb, n, c, h):
    return [
        pl.BlockSpec((gb, n, c), lambda i: (i, 0, 0)),
        pl.BlockSpec((c, h), lambda i: (0, 0)),
        pl.BlockSpec((c, h), lambda i: (0, 0)),
        pl.BlockSpec((1, h), lambda i: (0, 0)),
        pl.BlockSpec((h, h), lambda i: (0, 0)),
        pl.BlockSpec((1, h), lambda i: (0, 0)),
    ]


def edge_conv(x, wp, wq, ba, wb, bb, k, graphs_per_block=None):
    b, n, c = x.shape
    h = wp.shape[1]
    gb = graphs_per_block or _pick_gb(b)
    assert b % gb == 0 and 1 <= k <= n - 1
    return pl.pallas_call(
        functools.partial(edgeconv_kernel, k),
        grid=(b // gb,),
        in_specs=_edgeconv_in_specs(gb, n, c, h),
        out_specs=pl.BlockSpec((gb, n, h), lambda i: (i, 0, 0)),
        out_shape=jax.ShapeDtypeStruct((b, n, h), jnp.bfloat16),
        scratch_shapes=[pltpu.VMEM((k * gb * n, gb * n), jnp.bfloat16)],
        compiler_params=pltpu.CompilerParams(dimension_semantics=("parallel",)),
    )(x, wp, wq, ba, wb, bb)


def edge_conv_pool_head(x, wp, wq, ba, wb, bb, wh1, bh1, wh2t, bh2, k,
                        graphs_per_block=None):
    b, n, c = x.shape
    h = wp.shape[1]
    hh = wh1.shape[1]
    gb = graphs_per_block or _pick_gb(b)
    assert b % gb == 0 and 1 <= k <= n - 1
    in_specs = _edgeconv_in_specs(gb, n, c, h) + [
        pl.BlockSpec((h, hh), lambda i: (0, 0)),
        pl.BlockSpec((1, hh), lambda i: (0, 0)),
        pl.BlockSpec((1, hh), lambda i: (0, 0)),
        pl.BlockSpec((1, 1), lambda i: (0, 0)),
    ]
    return pl.pallas_call(
        functools.partial(edgeconv_pool_head_kernel, k),
        grid=(b // gb,),
        in_specs=in_specs,
        out_specs=pl.BlockSpec((gb, 1, 1), lambda i: (i, 0, 0)),
        out_shape=jax.ShapeDtypeStruct((b, 1, 1), jnp.float32),
        scratch_shapes=[pltpu.VMEM((k * gb * n, gb * n), jnp.bfloat16)],
        compiler_params=pltpu.CompilerParams(dimension_semantics=("parallel",)),
    )(x, wp, wq, ba, wb, bb, wh1, bh1, wh2t, bh2)


# ---------------------------------------------------------------------------
# Parameters (deterministic, PyTorch-Linear-style uniform init).
# ---------------------------------------------------------------------------
def init_linear(key, fan_in, fan_out):
    kw, kb = jax.random.split(key)
    bound = 1.0 / (fan_in ** 0.5)
    w = jax.random.uniform(kw, (fan_in, fan_out), jnp.float32, -bound, bound)
    b = jax.random.uniform(kb, (1, fan_out), jnp.float32, -bound, bound)
    return w, b


def init_params(key, c=128):
    keys = jax.random.split(key, 10)
    p = {}
    w1, b1 = init_linear(keys[0], 4, 64)
    w2, b2 = init_linear(keys[1], 64, c)
    p["enc1"] = (w1.astype(jnp.bfloat16), b1)
    p["enc2"] = (w2.astype(jnp.bfloat16), b2)
    for i in range(3):
        wa, ba = init_linear(keys[2 + 2 * i], 2 * c, c)   # MLP first linear (2C->C)
        wb, bb = init_linear(keys[3 + 2 * i], c, c)       # MLP second linear (C->C)
        wp = (wa[:c] - wa[c:]).astype(jnp.bfloat16)       # x_i coefficient
        wq = wa[c:].astype(jnp.bfloat16)                  # x_j coefficient
        p[f"ec{i + 1}"] = (wp, wq, ba, wb.astype(jnp.bfloat16), bb)
    wh1, bh1 = init_linear(keys[8], c, 64)
    wh2, bh2 = init_linear(keys[9], 64, 1)
    p["head1"] = (wh1.astype(jnp.bfloat16), bh1)
    p["head2"] = (wh2.T, bh2)                             # stored as (1, 64) f32
    return p


# ---------------------------------------------------------------------------
# Full forward pass (RechitGNN.forward)
# ---------------------------------------------------------------------------
def rechit_gnn_forward(params, x, k=16):
    b, n, fin = x.shape
    (w1, b1), (w2, b2) = params["enc1"], params["enc2"]
    h = encoder(x.reshape(b * n, fin), w1, b1, w2, b2).reshape(b, n, -1)

    h = edge_conv(h, *params["ec1"], k=k)               # dynamic-kNN EdgeConv 1
    h = edge_conv(h, *params["ec2"], k=k)               # dynamic-kNN EdgeConv 2
    out = edge_conv_pool_head(h, *params["ec3"],        # EdgeConv 3 + pool + head
                              *params["head1"], *params["head2"], k=k)
    return out.reshape(-1)                              # (B,)


if __name__ == "__main__":
    key = jax.random.PRNGKey(0)
    kx, kp = jax.random.split(key)

    B, N, Fin, K = 2, 32, 4, 16       # 2 graphs, 32 nodes each, 4 rechit features
    x = jax.random.normal(kx, (B, N, Fin), dtype=jnp.float32)
    params = init_params(kp)

    out = rechit_gnn_forward(params, x, k=K)
    out = jax.block_until_ready(out)
    assert out.shape == (B,)
    print("KERNEL_OK")
</pallas_src>

<mosaic_0001>
module attributes {stable_mosaic.version = 11 : i64} {
  func.func @encoder_kernel(%arg0: i32, %arg1: memref<32x4xf32, #tpu.memory_space<vmem>>, %arg2: memref<4x64xbf16, #tpu.memory_space<vmem>>, %arg3: memref<1x64xf32, #tpu.memory_space<vmem>>, %arg4: memref<64x128xbf16, #tpu.memory_space<vmem>>, %arg5: memref<1x128xf32, #tpu.memory_space<vmem>>, %arg6: memref<32x128xbf16, #tpu.memory_space<vmem>>) attributes {dimension_semantics = [#tpu.dimension_semantics<parallel>], iteration_bounds = array<i64: 2>, scalar_prefetch = 0 : i64, scratch_operands = 0 : i64, tpu.core_type = #tpu.core_type<tc>, window_params = [{transform_indices = @transform_0, window_bounds = array<i64: 32, 4>}, {pipeline_mode = #tpu.pipeline_mode<synchronous>, transform_indices = @transform_1, window_bounds = array<i64: 4, 64>}, {pipeline_mode = #tpu.pipeline_mode<synchronous>, transform_indices = @transform_2, window_bounds = array<i64: 1, 64>}, {pipeline_mode = #tpu.pipeline_mode<synchronous>, transform_indices = @transform_3, window_bounds = array<i64: 64, 128>}, {pipeline_mode = #tpu.pipeline_mode<synchronous>, transform_indices = @transform_4, window_bounds = array<i64: 1, 128>}, {transform_indices = @transform_5, window_bounds = array<i64: 32, 128>}]} {
    %c0 = arith.constant 0 : index
    %c0_0 = arith.constant 0 : index
    %0 = vector.load %arg1[%c0, %c0_0] : memref<32x4xf32, #tpu.memory_space<vmem>>, vector<32x4xf32>
    %1 = arith.truncf %0 : vector<32x4xf32> to vector<32x4xbf16>
    %c0_1 = arith.constant 0 : index
    %c0_2 = arith.constant 0 : index
    %2 = vector.load %arg2[%c0_1, %c0_2] : memref<4x64xbf16, #tpu.memory_space<vmem>>, vector<4x64xbf16>
    %cst = arith.constant dense<0.000000e+00> : vector<32x64xf32>
    %3 = tpu.matmul %1, %2, %cst {dimension_numbers = #tpu.dot_dimension_numbers<[1], [0], [0], [1], [0, 0, 1, 1], [], []>} : vector<32x4xbf16>, vector<4x64xbf16>, vector<32x64xf32> -> vector<32x64xf32>
    %c0_3 = arith.constant 0 : index
    %c0_4 = arith.constant 0 : index
    %4 = vector.load %arg3[%c0_3, %c0_4] : memref<1x64xf32, #tpu.memory_space<vmem>>, vector<1x64xf32>
    %5 = vector.broadcast %4 : vector<1x64xf32> to vector<32x64xf32>
    %6 = arith.addf %3, %5 : vector<32x64xf32>
    %cst_5 = arith.constant 0.000000e+00 : f32
    %7 = vector.broadcast %cst_5 : f32 to vector<32x64xf32>
    %8 = arith.maximumf %6, %7 : vector<32x64xf32>
    %9 = arith.truncf %8 : vector<32x64xf32> to vector<32x64xbf16>
    %c0_6 = arith.constant 0 : index
    %c0_7 = arith.constant 0 : index
    %10 = vector.load %arg4[%c0_6, %c0_7] : memref<64x128xbf16, #tpu.memory_space<vmem>>, vector<64x128xbf16>
    %cst_8 = arith.constant dense<0.000000e+00> : vector<32x128xf32>
    %11 = tpu.matmul %9, %10, %cst_8 {dimension_numbers = #tpu.dot_dimension_numbers<[1], [0], [0], [1], [0, 0, 1, 1], [], []>} : vector<32x64xbf16>, vector<64x128xbf16>, vector<32x128xf32> -> vector<32x128xf32>
    %c0_9 = arith.constant 0 : index
    %c0_10 = arith.constant 0 : index
    %12 = vector.load %arg5[%c0_9, %c0_10] : memref<1x128xf32, #tpu.memory_space<vmem>>, vector<1x128xf32>
    %13 = vector.broadcast %12 : vector<1x128xf32> to vector<32x128xf32>
    %14 = arith.addf %11, %13 : vector<32x128xf32>
    %cst_11 = arith.constant 0.000000e+00 : f32
    %15 = vector.broadcast %cst_11 : f32 to vector<32x128xf32>
    %16 = arith.maximumf %14, %15 : vector<32x128xf32>
    %17 = arith.truncf %16 : vector<32x128xf32> to vector<32x128xbf16>
    %c0_12 = arith.constant 0 : index
    %c0_13 = arith.constant 0 : index
    %18 = vector.load %arg6[%c0_12, %c0_13] : memref<32x128xbf16, #tpu.memory_space<vmem>>, vector<32x128xbf16>
    tpu.vector_store %arg6[%c0_12, %c0_13], %17 {strides = array<i32>} : memref<32x128xbf16, #tpu.memory_space<vmem>>, vector<32x128xbf16>,
    return
  }
  func.func @transform_0(%arg0: i32) -> (i32, i32) {
    %c0_i32 = arith.constant 0 : i32
    %c0_i32_0 = arith.constant 0 : i32
    return %arg0, %c0_i32 : i32, i32
  }
  func.func @transform_1(%arg0: i32) -> (i32, i32) {
    %c0_i32 = arith.constant 0 : i32
    %c0_i32_0 = arith.constant 0 : i32
    %c0_i32_1 = arith.constant 0 : i32
    return %c0_i32, %c0_i32_0 : i32, i32
  }
  func.func @transform_2(%arg0: i32) -> (i32, i32) {
    %c0_i32 = arith.constant 0 : i32
    %c0_i32_0 = arith.constant 0 : i32
    %c0_i32_1 = arith.constant 0 : i32
    return %c0_i32, %c0_i32_0 : i32, i32
  }
  func.func @transform_3(%arg0: i32) -> (i32, i32) {
    %c0_i32 = arith.constant 0 : i32
    %c0_i32_0 = arith.constant 0 : i32
    %c0_i32_1 = arith.constant 0 : i32
    return %c0_i32, %c0_i32_0 : i32, i32
  }
  func.func @transform_4(%arg0: i32) -> (i32, i32) {
    %c0_i32 = arith.constant 0 : i32
    %c0_i32_0 = arith.constant 0 : i32
    %c0_i32_1 = arith.constant 0 : i32
    return %c0_i32, %c0_i32_0 : i32, i32
  }
  func.func @transform_5(%arg0: i32) -> (i32, i32) {
    %c0_i32 = arith.constant 0 : i32
    %c0_i32_0 = arith.constant 0 : i32
    return %arg0, %c0_i32 : i32, i32
  }
}

</mosaic_0001>

<llo_original>
// kernel: tpu_custom_call.1
$region0: #{tpu_custom_call.1}
  #allocation0 [shape = 'u32[]', space=smem, size = 0x4, offset = 0x4, fixed_abs, tag = 'smem constant byte address 0x4 - core index']
  #allocation1 [shape = 'u32[144,128]{1,0:T(1,128)}', space=vmem, size = 0x12000, scoped, tag = 'internal scratch']
  %s0 = inlined_call_operand.vmem [shape: f32[64,4], index: 0, kind: input, shape index: {}]
  %s1 = inlined_call_operand.vmem [shape: bf16[4,64], index: 1, kind: input, shape index: {}]
  %s2 = inlined_call_operand.vmem [shape: f32[1,64], index: 2, kind: input, shape index: {}]
  %s3 = inlined_call_operand.vmem [shape: bf16[64,128], index: 3, kind: input, shape index: {}]
  %s4 = inlined_call_operand.vmem [shape: f32[1,128], index: 4, kind: input, shape index: {}]
  %s5 = inlined_call_operand.hbm [shape: bf16[64,128], index: 5, kind: output, shape index: {}]
  %s6 = sld [smem:[#allocation0]]
  $region53: #{tpu_custom_call.1} parent=0
    _
  %s8 = ssub.s32 1, %s6
  %s9 = scalar_select 0, %s8, %s6
  $region1: #{tpu_custom_call.1} parent=0
    #allocation2 [shape = 'u8[16384]{0}', space=vmem, size = 0x4000, scoped, tag = 'output window, operand 0']
    #allocation3 [shape = 's32[2]{0}', space=sflag, size = 0x8, scoped, tag = 'scoped memory for tpu_custom_call.1']
    %10 = vsyncpa [#allocation3], 0
    %s11 = scalar_lea.sflag [#allocation3], 1
    %12 = vsyncpa %s11, 0
    loop: start=0, step=1, limit=4
    $region2: #{tpu_custom_call.1} parent=1 // loop_pre_header
      _
    $region3: #{tpu_custom_call.1} parent=1 // loop_header
      %s14 = sphi 0, %s18
      %p15 = scmp.ge.s32.totalorder %s14, 4
      %s24 = sphi 0, %s26
      %s27 = sphi 0, %s24
      %s28 = sphi 0, %s27
      %s44 = sphi 0, %s28
      %s48 = sphi 0, %s48
      %s50 = sphi 0, %s48
      %s51 = sphi 0, %s50
      %s65 = sphi 0, %s51
      %s69 = sphi 0, %s69
      %s71 = sphi 0, %s69
      %s72 = sphi 0, %s71
      %s86 = sphi 0, %s72
      %s90 = sphi 0, %s90
      %s92 = sphi 0, %s90
      %s93 = sphi 0, %s92
      %s107 = sphi 0, %s93
      %s111 = sphi 0, %s111
      %s113 = sphi 0, %s111
      %s114 = sphi 0, %s113
      %s128 = sphi 0, %s114
      %s134 = sphi 0, %s136
      %s137 = sphi 0, %s134
      %s138 = sphi 0, %s137
      %s154 = sphi 0, %s138
    $region4: #{tpu_custom_call.1} parent=1 // loop_header_branch
      %17 = sbr.rel (%p15) target = $region8
    $region5: #{tpu_custom_call.1} parent=1 // loop_body
      %s19 = ssub.s32 %s14, 1
      %s20 = ssub.s32 %s14, 2
      %s21 = sadd.s32 %s14, 1
      %s22 = ssub.s32 %s14, %s21
      %p23 = scmp.eq.s32.totalorder %s22, 0
      %s25 = sadd.s32 %s24, 1
      %s26 = scalar_select %p23, %s24, %s25
      %p29 = pneg %p23
      %p30 = scmp.eq.s32.totalorder %s14, 1
      %p31 = por %p29, %p30
      %p32 = scmp.ne.s32.totalorder %s24, %s27
      %p33 = scmp.eq.s32.totalorder %s14, 0
      %p34 = por %p32, %p33
      %p35 = scmp.ne.s32.totalorder %s24, %s27
      %p36 = scmp.eq.s32.totalorder %s19, 1
      %p37 = por %p35, %p36
      %p38 = scmp.ne.s32.totalorder %s27, %s28
      %p39 = scmp.eq.s32.totalorder %s19, 0
      %p40 = por %p38, %p39
      %p41 = scmp.ne.s32.totalorder %s27, %s28
      %p42 = scmp.eq.s32.totalorder %s20, 1
      %p43 = por %p41, %p42
      %p45 = scmp.ne.s32.totalorder %s28, %s44
      %p46 = scmp.eq.s32.totalorder %s20, 0
      %p47 = por %p45, %p46
      %s49 = sadd.s32 %s48, 1
      %p52 = scmp.eq.s32.totalorder %s14, 1
      %p53 = scmp.ne.s32.totalorder %s48, %s50
      %p54 = scmp.eq.s32.totalorder %s14, 0
      %p55 = por %p53, %p54
      %p56 = scmp.ne.s32.totalorder %s48, %s50
      %p57 = scmp.eq.s32.totalorder %s19, 1
      %p58 = por %p56, %p57
      %p59 = scmp.ne.s32.totalorder %s50, %s51
      %p60 = scmp.eq.s32.totalorder %s19, 0
      %p61 = por %p59, %p60
      %p62 = scmp.ne.s32.totalorder %s50, %s51
      %p63 = scmp.eq.s32.totalorder %s20, 1
      %p64 = por %p62, %p63
      %p66 = scmp.ne.s32.totalorder %s51, %s65
      %p67 = scmp.eq.s32.totalorder %s20, 0
      %p68 = por %p66, %p67
      %s70 = sadd.s32 %s69, 1
      %p73 = scmp.eq.s32.totalorder %s14, 1
      %p74 = scmp.ne.s32.totalorder %s69, %s71
      %p75 = scmp.eq.s32.totalorder %s14, 0
      %p76 = por %p74, %p75
      %p77 = scmp.ne.s32.totalorder %s69, %s71
      %p78 = scmp.eq.s32.totalorder %s19, 1
      %p79 = por %p77, %p78
      %p80 = scmp.ne.s32.totalorder %s71, %s72
      %p81 = scmp.eq.s32.totalorder %s19, 0
      %p82 = por %p80, %p81
      %p83 = scmp.ne.s32.totalorder %s71, %s72
      %p84 = scmp.eq.s32.totalorder %s20, 1
      %p85 = por %p83, %p84
      %p87 = scmp.ne.s32.totalorder %s72, %s86
      %p88 = scmp.eq.s32.totalorder %s20, 0
      %p89 = por %p87, %p88
      %s91 = sadd.s32 %s90, 1
      %p94 = scmp.eq.s32.totalorder %s14, 1
      %p95 = scmp.ne.s32.totalorder %s90, %s92
      %p96 = scmp.eq.s32.totalorder %s14, 0
      %p97 = por %p95, %p96
      %p98 = scmp.ne.s32.totalorder %s90, %s92
      %p99 = scmp.eq.s32.totalorder %s19, 1
      %p100 = por %p98, %p99
      %p101 = scmp.ne.s32.totalorder %s92, %s93
      %p102 = scmp.eq.s32.totalorder %s19, 0
      %p103 = por %p101, %p102
      %p104 = scmp.ne.s32.totalorder %s92, %s93
      %p105 = scmp.eq.s32.totalorder %s20, 1
      %p106 = por %p104, %p105
      %p108 = scmp.ne.s32.totalorder %s93, %s107
      %p109 = scmp.eq.s32.totalorder %s20, 0
      %p110 = por %p108, %p109
      %s112 = sadd.s32 %s111, 1
      %p115 = scmp.eq.s32.totalorder %s14, 1
      %p116 = scmp.ne.s32.totalorder %s111, %s113
      %p117 = scmp.eq.s32.totalorder %s14, 0
      %p118 = por %p116, %p117
      %p119 = scmp.ne.s32.totalorder %s111, %s113
      %p120 = scmp.eq.s32.totalorder %s19, 1
      %p121 = por %p119, %p120
      %p122 = scmp.ne.s32.totalorder %s113, %s114
      %p123 = scmp.eq.s32.totalorder %s19, 0
      %p124 = por %p122, %p123
      %p125 = scmp.ne.s32.totalorder %s113, %s114
      %p126 = scmp.eq.s32.totalorder %s20, 1
      %p127 = por %p125, %p126
      %p129 = scmp.ne.s32.totalorder %s114, %s128
      %p130 = scmp.eq.s32.totalorder %s20, 0
      %p131 = por %p129, %p130
      %s132 = ssub.s32 %s14, %s21
      %p133 = scmp.eq.s32.totalorder %s132, 0
      %s135 = sadd.s32 %s134, 1
      %s136 = scalar_select %p133, %s134, %s135
      %p139 = pneg %p133
      %p140 = scmp.eq.s32.totalorder %s14, 1
      %p141 = por %p139, %p140
      %p142 = scmp.ne.s32.totalorder %s134, %s137
      %p143 = scmp.eq.s32.totalorder %s14, 0
      %p144 = por %p142, %p143
      %p145 = scmp.ne.s32.totalorder %s134, %s137
      %p146 = scmp.eq.s32.totalorder %s19, 1
      %p147 = por %p145, %p146
      %p148 = scmp.ne.s32.totalorder %s137, %s138
      %p149 = scmp.eq.s32.totalorder %s19, 0
      %p150 = por %p148, %p149
      %p151 = scmp.ne.s32.totalorder %s137, %s138
      %p152 = scmp.eq.s32.totalorder %s20, 1
      %p153 = por %p151, %p152
      %p155 = scmp.ne.s32.totalorder %s138, %s154
      %p156 = scmp.eq.s32.totalorder %s20, 0
      %p157 = por %p155, %p156
      %p158 = scmp.le.s32.totalorder 1, %s14
      %p159 = scmp.lt.s32.totalorder %s14, 3
      %p160 = pnand %p158, %p159
      %p161 = pneg %p160
      // Predicated region
      $region9: #{tpu_custom_call.1} parent=5 // pred_check
        _
      $region10: #{tpu_custom_call.1} parent=5 // pred_check_branch
        %163 = sbr.rel (%p160) target = $region12
      $region11: #{tpu_custom_call.1} parent=5 // pred_region
        %s164 = ssub.s32 %s14, 1
        // Predicated region
        $region13: #{tpu_custom_call.1} parent=11 // pred_check
          %p165 = pneg %p61
        $region14: #{tpu_custom_call.1} parent=11 // pred_check_branch
          %167 = sbr.rel (%p165) target = $region16
        $region15: #{tpu_custom_call.1} parent=11 // pred_region
          _
        $region16: #{tpu_custom_call.1} parent=11 // pred_fallthru
          _
        // Predicated region
        $region17: #{tpu_custom_call.1} parent=11 // pred_check
          %p168 = pneg %p82
        $region18: #{tpu_custom_call.1} parent=11 // pred_check_branch
          %170 = sbr.rel (%p168) target = $region20
        $region19: #{tpu_custom_call.1} parent=11 // pred_region
          _
        $region20: #{tpu_custom_call.1} parent=11 // pred_fallthru
          _
        // Predicated region
        $region21: #{tpu_custom_call.1} parent=11 // pred_check
          %p171 = pneg %p103
        $region22: #{tpu_custom_call.1} parent=11 // pred_check_branch
          %173 = sbr.rel (%p171) target = $region24
        $region23: #{tpu_custom_call.1} parent=11 // pred_region
          _
        $region24: #{tpu_custom_call.1} parent=11 // pred_fallthru
          _
        // Predicated region
        $region25: #{tpu_custom_call.1} parent=11 // pred_check
          %p174 = pneg %p124
        $region26: #{tpu_custom_call.1} parent=11 // pred_check_branch
          %176 = sbr.rel (%p174) target = $region28
        $region27: #{tpu_custom_call.1} parent=11 // pred_region
          _
        $region28: #{tpu_custom_call.1} parent=11 // pred_fallthru
          _
      $region12: #{tpu_custom_call.1} parent=5 // pred_fallthru
        _
      %p177 = scmp.lt.s32.totalorder %s14, 2
      // Predicated region
      $region29: #{tpu_custom_call.1} parent=5 // pred_check
        %p178 = pneg %p177
      $region30: #{tpu_custom_call.1} parent=5 // pred_check_branch
        %180 = sbr.rel (%p178) target = $region32
      $region31: #{tpu_custom_call.1} parent=5 // pred_region
        // Predicated region
        $region33: #{tpu_custom_call.1} parent=31 // pred_check
          %p181 = pneg %p34
        $region34: #{tpu_custom_call.1} parent=31 // pred_check_branch
          %183 = sbr.rel (%p181) target = $region36
        $region35: #{tpu_custom_call.1} parent=31 // pred_region
          %s184 = smul.u32 4, %s14
          %p185 = scmp.lt.s32.totalorder %s184, 7
          %s186 = scalar_select %p185, %s184, 7
          %s187 = smul.addr %s186, 8
          %s188 = scalar_lea.vmem %s0, %s187
          %s189 = smul.u32 4, %s14
        $region36: #{tpu_custom_call.1} parent=31 // pred_fallthru
          _
      $region32: #{tpu_custom_call.1} parent=5 // pred_fallthru
        _
      %p190 = scmp.le.s32.totalorder 1, %s14
      %p191 = scmp.lt.s32.totalorder %s14, 3
      %p192 = pnand %p190, %p191
      %p193 = pneg %p192
      // Predicated region
      $region37: #{tpu_custom_call.1} parent=5 // pred_check
        _
      $region38: #{tpu_custom_call.1} parent=5 // pred_check_branch
        %195 = sbr.rel (%p192) target = $region40
      $region39: #{tpu_custom_call.1} parent=5 // pred_region
        %s196 = ssub.s32 %s14, 1
        %s197 = smul.u32 4, %s19
        %p198 = scmp.lt.s32.totalorder %s197, 7
        %s199 = scalar_select %p198, %s197, 7
        %s200 = smul.addr %s199, 8
        %s201 = scalar_lea.vmem %s0, %s200
        %p202 = pneg %p40
        %p203 = pneg %p37
        %p204 = pneg %p61
        %p205 = pneg %p58
        %p206 = pneg %p82
        %p207 = pneg %p79
        %p208 = pneg %p103
        %p209 = pneg %p100
        %p210 = pneg %p124
        %p211 = pneg %p121
        %p212 = pneg %p150
        %p213 = pneg %p147
        %s214 = sand.u32 %s137, 1
        %s215 = scalar_lea.sflag [#allocation3], %s214
        %s216 = sand.u32 %s137, 1
        %s217 = smul.addr %s216, 16
        %s218 = scalar_lea.vmem [#allocation2], %s217
        %s219 = smul.u32 4, %s19
        %p220 = scmp.lt.s32.totalorder %s219, 7
        %s221 = scalar_select %p220, %s219, 7
        %s222 = smul.addr %s221, 8
        %s223 = scalar_lea.vmem %s0, %s222
        %s224 = smul.u32 4, %s19
        %s225 = smul.u32 4, %s19
        %v227 = vld [vmem:[%s223] sm:$0xff]
        %v228 = vld [vmem:[%s223 + $0x8] sm:$0xff]
        %v229 = vld [vmem:[%s223 + $0x10] sm:$0xff]
        %v230 = vld [vmem:[%s223 + $0x18] sm:$0xff]
        %v231 = vpack.c.bf16 %v228, %v227
        %v232 = vpack.c.bf16 %v230, %v229
        %v233 = vld [vmem:[%s1] sm:$0x3]
        %v234 = vld [vmem:[%s2] sm:$0x1]
        %v236 = vlaneseq
        %v237 = vshrl.u32 %v236, 7
        %v238 = vsub.s32 0, %v237
        %v239 = vrot.slane %v234, %v238
        %vm241 = vcmask 31744
        %v243 = vsel %vm241, %v231, 0
        %v246 = vsel %vm241, %v232, 0
        %vm248 = vcmask 1041408
        %v250 = vsel %vm248, %v233, 0
        %252 = vmatprep.subr.bf16.mxu0 0
        %253 = vmatpush1.bf16.msra.mxu0 0
        %254 = vmatprep.subr.bf16.mxu0 0
        %255 = vmatpush1.bf16.msra.mxu0 0
        %256 = vmatprep.subr.bf16.mxu0 0
        %257 = vmatpush1.bf16.msra.mxu0 0
        %258 = vmatprep.subr.bf16.mxu0 0
        %259 = vmatpush1.bf16.msra.mxu0 0
        %260 = vmatprep.subr.bf16.mxu0 0
        %261 = vmatpush1.bf16.msra.mxu0 0
        %262 = vmatprep.subr.bf16.mxu0 0
        %263 = vmatpush1.bf16.msra.mxu0 0
        %264 = vmatprep.subr.bf16.mxu0 0
        %265 = vmatpush1.bf16.msra.mxu0 0
        %266 = vmatprep.subr.bf16.mxu0 0
        %267 = vmatpush1.bf16.msra.mxu0 %v250
        %268 = vmatprep.subr.bf16.mxu0 0
        %269 = vmatpush2.bf16.msra.mxu0 0
        %270 = vmatprep.subr.bf16.mxu0 0
        %271 = vmatpush2.bf16.msra.mxu0 0
        %272 = vmatprep.subr.bf16.mxu0 0
        %273 = vmatpush2.bf16.msra.mxu0 0
        %274 = vmatprep.subr.bf16.mxu0 0
        %275 = vmatpush2.bf16.msra.mxu0 0
        %276 = vmatprep.subr.bf16.mxu0 0
        %277 = vmatpush2.bf16.msra.mxu0 0
        %278 = vmatprep.subr.bf16.mxu0 0
        %279 = vmatpush2.bf16.msra.mxu0 0
        %280 = vmatprep.subr.bf16.mxu0 0
        %281 = vmatpush2.bf16.msra.mxu0 0
        %282 = vmatprep.subr.bf16.mxu0 0
        %283 = vmatpush2.bf16.msra.mxu0 0
        %284 = vmatprep.mubr.bf16.mxu0 0
        %285 = vmatmul.mubr.bf16.gmra.mxu0 %v243
        %v286 = vpop.f32.mrf.mxu0
        %v287 = vadd.f32 %v239, %v286
        %v288 = vpop.f32.mrf.mxu0
        %v289 = vpop.f32.mrf.mxu0
        %v290 = vadd.f32 %v239, %v289
        %v291 = vpop.f32.mrf.mxu0
        %292 = vmatprep.mubr.bf16.mxu0 0
        %293 = vmatmul.mubr.bf16.gmra.mxu0 %v246
        %v294 = vpop.f32.mrf.mxu0
        %v295 = vadd.f32 %v239, %v294
        %v296 = vpop.f32.mrf.mxu0
        %v297 = vpop.f32.mrf.mxu0
        %v298 = vadd.f32 %v239, %v297
        %v299 = vpop.f32.mrf.mxu0
        %300 = vdwg.mxu0
        %v301 = vmax.f32 %v287, 0.0
        %v302 = vmax.f32 %v290, 0.0
        %v303 = vmax.f32 %v295, 0.0
        %v304 = vmax.f32 %v298, 0.0
        %v305 = vpack.c.bf16 %v302, %v301
        %v306 = vpack.c.bf16 %v304, %v303
        %v307 = vld [vmem:[%s3] sm:$0xf]
        %v308 = vld [vmem:[%s3 + $0x4] sm:$0xf]
        %v309 = vld [vmem:[%s3 + $0x8] sm:$0xf]
        %v310 = vld [vmem:[%s3 + $0xc] sm:$0xf]
        %v311 = vld [vmem:[%s3 + $0x10] sm:$0xf]
        %v312 = vld [vmem:[%s3 + $0x14] sm:$0xf]
        %v313 = vld [vmem:[%s3 + $0x18] sm:$0xf]
        %v314 = vld [vmem:[%s3 + $0x1c] sm:$0xf]
        %v315 = vld [vmem:[%s4] sm:$0x1]
        %v317 = vlaneseq
        %v318 = vshrl.u32 %v317, 7
        %v319 = vsub.s32 0, %v318
        %v320 = vrot.slane %v315, %v319
        %v330 = vunpack.c.l.b16 %v307
        %v331 = vunpack.c.l.b16 %v308
        %v332 = vunpack.c.l.b16 %v309
        %v333 = vunpack.c.l.b16 %v310
        %v334 = vunpack.c.l.b16 %v311
        %v335 = vunpack.c.l.b16 %v312
        %v336 = vunpack.c.l.b16 %v313
        %v337 = vunpack.c.l.b16 %v314
        %v338 = vpack.c.b16 %v331, %v330
        %v339 = vpack.c.b16 %v333, %v332
        %v340 = vpack.c.b16 %v335, %v334
        %v341 = vpack.c.b16 %v337, %v336
        %vm346 = vcmask 523264
        %v348 = vsel %vm346, %v305, 0
        %v351 = vsel %vm346, %v306, 0
        %353 = vmatprep.subr.bf16.mxu0 0
        %354 = vmatpush1.bf16.msra.mxu0 0
        %355 = vmatprep.subr.bf16.mxu0 0
        %356 = vmatpush1.bf16.msra.mxu0 0
        %357 = vmatprep.subr.bf16.mxu0 0
        %358 = vmatpush1.bf16.msra.mxu0 0
        %359 = vmatprep.subr.bf16.mxu0 0
        %360 = vmatpush1.bf16.msra.mxu0 0
        %361 = vmatprep.subr.bf16.mxu0 0
        %362 = vmatpush1.bf16.msra.mxu0 %v341
        %363 = vmatprep.subr.bf16.mxu0 0
        %364 = vmatpush1.bf16.msra.mxu0 %v340
        %365 = vmatprep.subr.bf16.mxu0 0
        %366 = vmatpush1.bf16.msra.mxu0 %v339
        %367 = vmatprep.subr.bf16.mxu0 0
        %368 = vmatpush1.bf16.msra.mxu0 %v338
        %369 = vmatprep.subr.bf16.mxu0 0
        %370 = vmatpush2.bf16.msra.mxu0 0
        %371 = vmatprep.subr.bf16.mxu0 0
        %372 = vmatpush2.bf16.msra.mxu0 0
        %373 = vmatprep.subr.bf16.mxu0 0
        %374 = vmatpush2.bf16.msra.mxu0 0
        %375 = vmatprep.subr.bf16.mxu0 0
        %376 = vmatpush2.bf16.msra.mxu0 0
        %377 = vmatprep.subr.bf16.mxu0 0
        %378 = vmatpush2.bf16.msra.mxu0 0
        %379 = vmatprep.subr.bf16.mxu0 0
        %380 = vmatpush2.bf16.msra.mxu0 0
        %381 = vmatprep.subr.bf16.mxu0 0
        %382 = vmatpush2.bf16.msra.mxu0 0
        %383 = vmatprep.subr.bf16.mxu0 0
        %384 = vmatpush2.bf16.msra.mxu0 0
        %385 = vmatprep.mubr.bf16.mxu0 0
        %386 = vmatmul.mubr.bf16.gmra.mxu0 %v348
        %v387 = vpop.f32.mrf.mxu0
        %v388 = vadd.f32 %v320, %v387
        %v389 = vpop.f32.mrf.mxu0
        %v390 = vpop.f32.mrf.mxu0
        %v391 = vadd.f32 %v320, %v390
        %v392 = vpop.f32.mrf.mxu0
        %393 = vmatprep.mubr.bf16.mxu0 0
        %394 = vmatmul.mubr.bf16.gmra.mxu0 %v351
        %v395 = vpop.f32.mrf.mxu0
        %v396 = vadd.f32 %v320, %v395
        %v397 = vpop.f32.mrf.mxu0
        %v398 = vpop.f32.mrf.mxu0
        %v399 = vadd.f32 %v320, %v398
        %v400 = vpop.f32.mrf.mxu0
        %401 = vdwg.mxu0
        %v402 = vmax.f32 %v388, 0.0
        %v403 = vmax.f32 %v391, 0.0
        %v404 = vmax.f32 %v396, 0.0
        %v405 = vmax.f32 %v399, 0.0
        %v406 = vpack.c.bf16 %v403, %v402
        %v407 = vpack.c.bf16 %v405, %v404
        %v410 = vunpack.c.l.b16 %v406
        %v411 = vunpack.c.h.b16 %v406
        %v412 = vunpack.c.l.b16 %v407
        %v413 = vunpack.c.h.b16 %v407
        %v414 = vpack.c.b16 %v410, %v410
        %v415 = vpack.c.b16 %v411, %v411
        %v416 = vpack.c.b16 %v412, %v412
        %v417 = vpack.c.b16 %v413, %v413
        %422 = vst [vmem:[%s218] sm:$0xf] %v414
        %423 = vst [vmem:[%s218 + $0x4] sm:$0xf] %v415
        %424 = vst [vmem:[%s218 + $0x8] sm:$0xf] %v416
        %425 = vst [vmem:[%s218 + $0xc] sm:$0xf] %v417
        %s426 = sand.u32 %s137, 1
        %s427 = scalar_lea.sflag [#allocation3], %s426
        %s428 = sand.u32 %s137, 1
        %s429 = smul.addr %s428, 16
        %s430 = scalar_lea.vmem [#allocation2], %s429
        // Predicated region
        $region41: #{tpu_custom_call.1} parent=39 // pred_check
          %p431 = pneg %p147
        $region42: #{tpu_custom_call.1} parent=39 // pred_check_branch
          %433 = sbr.rel (%p431) target = $region44
        $region43: #{tpu_custom_call.1} parent=39 // pred_region
          %s434 = smul.u32 4, %s19
          %s436 = ssub.s32 256, 256
          %437 = vsyncadd %s427, %s436
          %s438 = smul.addr %s434, 64
          %s439 = scalar_lea.hbm %s5, %s438
          %s440 = sshll.u32 %s430, 4
          %s441 = int_to_ptr.vmem [resolvable:$true] %s440
          %446 = dma.vmem_to_hbm [thread:$0]  %s441, 256, %s439, %s427, 64, 64, 4
        $region44: #{tpu_custom_call.1} parent=39 // pred_fallthru
          _
      $region40: #{tpu_custom_call.1} parent=5 // pred_fallthru
        _
      %p447 = scmp.le.s32.totalorder 2, %s14
      // Predicated region
      $region45: #{tpu_custom_call.1} parent=5 // pred_check
        %p448 = pneg %p447
      $region46: #{tpu_custom_call.1} parent=5 // pred_check_branch
        %450 = sbr.rel (%p448) target = $region48
      $region47: #{tpu_custom_call.1} parent=5 // pred_region
        %s451 = ssub.s32 %s14, 2
        // Predicated region
        $region49: #{tpu_custom_call.1} parent=47 // pred_check
          %p452 = pneg %p153
        $region50: #{tpu_custom_call.1} parent=47 // pred_check_branch
          %454 = sbr.rel (%p452) target = $region52
        $region51: #{tpu_custom_call.1} parent=47 // pred_region
          %s455 = sand.u32 %s138, 1
          %s456 = scalar_lea.sflag [#allocation3], %s455
          %s457 = sand.u32 %s138, 1
          %s458 = smul.addr %s457, 16
          %s459 = scalar_lea.vmem [#allocation2], %s458
          %460 = dma.done %s456, 256
        $region52: #{tpu_custom_call.1} parent=47 // pred_fallthru
          _
      $region48: #{tpu_custom_call.1} parent=5 // pred_fallthru
        _
    $region6: #{tpu_custom_call.1} parent=1 // loop_footer
      %s18 = sadd.s32 1, %s14
    $region7: #{tpu_custom_call.1} parent=1 // loop_footer_branch
      %13 = sbr.rel target = $region3
    $region8: #{tpu_custom_call.1} parent=1 // loop_exit
      _
    %461 = vsyncpa [#allocation3], 1
    %s462 = scalar_lea.sflag [#allocation3], 1
    %463 = vsyncpa %s462, 1

</llo_original>
